<compile_context>
chip_gen: v5e
topology: v5e:2x2
jax: 0.10.0
libtpu: 0.0.40
codegen_flags: <defaults>
</compile_context>

<pallas_src>
import jax
import jax.numpy as jnp
from jax import lax
from jax.experimental import pallas as pl
from jax.experimental.pallas import tpu as pltpu


def _round_up(x, m):
    return (x + m - 1) // m * m


def _patch_matmul_kernel(p_ref, w_ref, b_ref, o_ref):
    # p_ref: (tm, K)  patch rows (compute dtype, e.g. bf16)
    # w_ref: (K, tn)  flattened conv weight (VMEM-resident across M tiles)
    # b_ref: (1, tn)  bias, f32 (VMEM-resident across M tiles)
    # o_ref: (tm, tn) output tile (input dtype, lane-dense)
    # Single full-K dot: the MXU accumulates in f32 internally, so no scratch
    # accumulator or K-axis init/finalize is needed.
    o_ref[...] = (
        jnp.dot(p_ref[...], w_ref[...], preferred_element_type=jnp.float32)
        + b_ref[...]
    ).astype(o_ref.dtype)


def patch_embed_forward(x, weight, bias, patch_size, stride, *,
                        compute_dtype=jnp.bfloat16):
    """
    x:      [B, C, img_size, img_size]   (NCHW, like PyTorch)
    weight: [embed_dim, C, P, P]         (PyTorch Conv2d weight layout)
    bias:   [embed_dim]
    returns [B, num_patches, embed_dim]  (dtype of x)
    """
    B, C, H, W = x.shape
    E = weight.shape[0]
    Ho = (H - patch_size) // stride + 1
    Wo = (W - patch_size) // stride + 1
    num_patches = Ho * Wo
    K = C * patch_size * patch_size
    M = B * num_patches

    if compute_dtype is None:
        compute_dtype = x.dtype
    out_dtype = x.dtype

    # Cast BEFORE im2col so the (overlap-inflated) patch buffer itself is bf16.
    xc = x.astype(compute_dtype)

    # Fused im2col: [B, Ho, Wo, C*P*P]; feature dim is channel-major
    # (c, kh, kw), matching weight.reshape(E, C*P*P).
    patches = lax.conv_general_dilated_patches(
        xc,
        filter_shape=(patch_size, patch_size),
        window_strides=(stride, stride),
        padding="VALID",
        dimension_numbers=("NCHW", "OIHW", "NHWC"),
    ).reshape(M, K)                                          # [M, K]

    w_flat = weight.reshape(E, K).T.astype(compute_dtype)    # [K, E]
    b_row = bias.reshape(1, E).astype(jnp.float32)           # [1, E]

    # Tile sizes.  No K axis (full-K dot).  N tile = full padded E when it
    # fits, so the whole weight + bias stay VMEM-resident across all M tiles.
    tm = min(512, _round_up(M, 16))      # 16: bf16 sublane packing for tiny M
    Ep = _round_up(E, 128)
    tn = min(1024, Ep)
    Ep = _round_up(Ep, tn)               # no-op when tn == Ep
    Mp = _round_up(M, tm)

    # Pad only the small operands plus (at most tm-1) rows of M so the grid
    # divides exactly.  With allow_input_fusion below, XLA may fold the
    # im2col/reshape/pad producer chain into the kernel's input DMAs.
    if Mp != M:
        patches = jnp.pad(patches, ((0, Mp - M), (0, 0)))
    if Ep != E:
        w_flat = jnp.pad(w_flat, ((0, 0), (0, Ep - E)))
        b_row = jnp.pad(b_row, ((0, 0), (0, Ep - E)))

    # Grid: N outer, M inner (fastest) -> weight/bias block indices are
    # invariant across the M sweep, so they are fetched once per N tile.
    grid = (Ep // tn, Mp // tm)

    out = pl.pallas_call(
        _patch_matmul_kernel,
        out_shape=jax.ShapeDtypeStruct((Mp, Ep), out_dtype),
        grid_spec=pltpu.PrefetchScalarGridSpec(
            num_scalar_prefetch=0,
            grid=grid,
            in_specs=[
                pl.BlockSpec((tm, K), lambda j, i: (i, 0)),   # patch stream
                pl.BlockSpec((K, tn), lambda j, i: (0, j)),   # weight, resident
                pl.BlockSpec((1, tn), lambda j, i: (0, j)),   # bias, resident
            ],
            out_specs=pl.BlockSpec((tm, tn), lambda j, i: (i, j)),
        ),
        compiler_params=pltpu.CompilerParams(
            dimension_semantics=("parallel", "parallel"),
            vmem_limit_bytes=48 * 1024 * 1024,   # safe on v5e/v6e and v7x
            allow_input_fusion=[True, False, False],
        ),
    )(patches, w_flat, b_row)

    return out[:M, :E].reshape(B, num_patches, E)


if __name__ == "__main__":
    # Small config consistent with the module (scaled down):
    #   img_size=16, patch_size=8, stride=4, channels=4, embed_dim=32, batch=2
    B, C, img_size = 2, 4, 16
    patch_size, stride, embed_dim = 8, 4, 32
    Ho = (img_size - patch_size) // stride + 1
    num_patches = Ho * Ho  # 9

    key = jax.random.PRNGKey(0)
    kx, kw, kb = jax.random.split(key, 3)
    x = jax.random.normal(kx, (B, C, img_size, img_size), dtype=jnp.float32)
    # Deterministic Conv2d-shaped params: [embed_dim, C, P, P]
    fan_in = C * patch_size * patch_size
    bound = 1.0 / (fan_in ** 0.5)
    proj_weight = jax.random.uniform(
        kw, (embed_dim, C, patch_size, patch_size),
        dtype=jnp.float32, minval=-bound, maxval=bound)
    proj_bias = jax.random.uniform(
        kb, (embed_dim,), dtype=jnp.float32, minval=-bound, maxval=bound)

    out = patch_embed_forward(x, proj_weight, proj_bias, patch_size, stride)
    out = jax.block_until_ready(out)
    assert out.shape == (B, num_patches, embed_dim), out.shape

    # Reference: XLA strided conv on the same bf16-cast operands (the kernel's
    # compute dtype), f32 accumulation, then flatten(2).transpose(1, 2).
    xb = x.astype(jnp.bfloat16).astype(jnp.float32)
    wb = proj_weight.astype(jnp.bfloat16).astype(jnp.float32)
    ref = lax.conv_general_dilated(
        xb, wb, window_strides=(stride, stride), padding="VALID",
        dimension_numbers=("NCHW", "OIHW", "NCHW"),
        precision=lax.Precision.HIGHEST)
    ref = ref.reshape(B, embed_dim, num_patches).transpose(0, 2, 1)
    ref = ref + proj_bias[None, None, :]
    err = float(jnp.max(jnp.abs(out - ref)))
    assert jnp.allclose(out, ref, atol=1e-2, rtol=1e-2), f"mismatch: {err}"

    print("KERNEL_OK")
</pallas_src>

<mosaic_0001>
module attributes {stable_mosaic.version = 11 : i64} {
  func.func @_patch_matmul_kernel(%arg0: i32, %arg1: i32, %arg2: memref<32x256xbf16, #tpu.memory_space<vmem>>, %arg3: memref<256x128xbf16, #tpu.memory_space<vmem>>, %arg4: memref<1x128xf32, #tpu.memory_space<vmem>>, %arg5: memref<32x128xf32, #tpu.memory_space<vmem>>) attributes {dimension_semantics = [#tpu.dimension_semantics<parallel>, #tpu.dimension_semantics<parallel>], iteration_bounds = array<i64: 1, 1>, scalar_prefetch = 0 : i64, scratch_operands = 0 : i64, tpu.core_type = #tpu.core_type<tc>, window_params = [{transform_indices = @transform_0, window_bounds = array<i64: 32, 256>}, {transform_indices = @transform_1, window_bounds = array<i64: 256, 128>}, {transform_indices = @transform_2, window_bounds = array<i64: 1, 128>}, {transform_indices = @transform_3, window_bounds = array<i64: 32, 128>}]} {
    %c0 = arith.constant 0 : index
    %c0_0 = arith.constant 0 : index
    %0 = vector.load %arg2[%c0, %c0_0] : memref<32x256xbf16, #tpu.memory_space<vmem>>, vector<32x256xbf16>
    %c0_1 = arith.constant 0 : index
    %c0_2 = arith.constant 0 : index
    %1 = vector.load %arg3[%c0_1, %c0_2] : memref<256x128xbf16, #tpu.memory_space<vmem>>, vector<256x128xbf16>
    %cst = arith.constant dense<0.000000e+00> : vector<32x128xf32>
    %2 = tpu.matmul %0, %1, %cst {dimension_numbers = #tpu.dot_dimension_numbers<[1], [0], [0], [1], [0, 0, 1, 1], [], []>} : vector<32x256xbf16>, vector<256x128xbf16>, vector<32x128xf32> -> vector<32x128xf32>
    %c0_3 = arith.constant 0 : index
    %c0_4 = arith.constant 0 : index
    %3 = vector.load %arg4[%c0_3, %c0_4] : memref<1x128xf32, #tpu.memory_space<vmem>>, vector<1x128xf32>
    %4 = vector.broadcast %3 : vector<1x128xf32> to vector<32x128xf32>
    %5 = arith.addf %2, %4 : vector<32x128xf32>
    %c0_5 = arith.constant 0 : index
    %c0_6 = arith.constant 0 : index
    %6 = vector.load %arg5[%c0_5, %c0_6] : memref<32x128xf32, #tpu.memory_space<vmem>>, vector<32x128xf32>
    tpu.vector_store %arg5[%c0_5, %c0_6], %5 {strides = array<i32>} : memref<32x128xf32, #tpu.memory_space<vmem>>, vector<32x128xf32>,
    return
  }
  func.func @transform_0(%arg0: i32, %arg1: i32) -> (i32, i32) {
    %c0_i32 = arith.constant 0 : i32
    %c0_i32_0 = arith.constant 0 : i32
    return %arg1, %c0_i32 : i32, i32
  }
  func.func @transform_1(%arg0: i32, %arg1: i32) -> (i32, i32) {
    %c0_i32 = arith.constant 0 : i32
    %c0_i32_0 = arith.constant 0 : i32
    return %c0_i32, %arg0 : i32, i32
  }
  func.func @transform_2(%arg0: i32, %arg1: i32) -> (i32, i32) {
    %c0_i32 = arith.constant 0 : i32
    %c0_i32_0 = arith.constant 0 : i32
    return %c0_i32, %arg0 : i32, i32
  }
  func.func @transform_3(%arg0: i32, %arg1: i32) -> (i32, i32) {
    %c0_i32 = arith.constant 0 : i32
    return %arg1, %arg0 : i32, i32
  }
}

</mosaic_0001>

<llo_original>
// kernel: tpu_custom_call.1
$region0: #{tpu_custom_call.1}
  #allocation0 [shape = 'u32[]', space=smem, size = 0x4, offset = 0x4, fixed_abs, tag = 'smem constant byte address 0x4 - core index']
  #allocation1 [shape = 'u32[72,128]{1,0:T(1,128)}', space=vmem, size = 0x9000, scoped, tag = 'internal scratch']
  %s0 = inlined_call_operand.hbm [shape: bf16[32,256], index: 0, kind: input, shape index: {}]
  %s1 = inlined_call_operand.hbm [shape: bf16[256,128], index: 1, kind: input, shape index: {}]
  %s2 = inlined_call_operand.vmem [shape: f32[1,128], index: 2, kind: input, shape index: {}]
  %s3 = inlined_call_operand.hbm [shape: f32[32,128], index: 3, kind: output, shape index: {}]
  %s4 = sld [smem:[#allocation0]]
  $region30: #{tpu_custom_call.1} parent=0
    _
  %s6 = ssub.s32 1, %s4
  %s7 = scalar_select 0, %s6, %s4
  $region1: #{tpu_custom_call.1} parent=0
    #allocation2 [shape = 'u8[16384]{0}', space=vmem, size = 0x4000, scoped, tag = 'input window, operand 0, single buffered']
    #allocation3 [shape = 's32[1]{0}', space=sflag, size = 0x4, scoped, tag = 'scoped memory for tpu_custom_call.1']
    #allocation4 [shape = 's32[1]{0}', space=sflag, size = 0x4, scoped, tag = 'scoped memory for tpu_custom_call.1']
    #allocation5 [shape = 'u8[65536]{0}', space=vmem, size = 0x10000, scoped, tag = 'input window, operand 1, single buffered']
    #allocation6 [shape = 's32[1]{0}', space=sflag, size = 0x4, scoped, tag = 'scoped memory for tpu_custom_call.1']
    #allocation7 [shape = 'u8[16384]{0}', space=vmem, size = 0x4000, scoped, tag = 'output window, operand 0, single buffered']
    %8 = vsyncpa [#allocation3], 0
    %9 = vsyncpa [#allocation6], 0
    %10 = vsyncpa [#allocation4], 0
    // Predicated region
    $region2: #{tpu_custom_call.1} parent=1 // pred_check
      _
    $region3: #{tpu_custom_call.1} parent=1 // pred_check_branch
      %12 = sbr.rel (0) target = $region5
    $region4: #{tpu_custom_call.1} parent=1 // pred_region
      %14 = vsyncadd [#allocation3], 0
      %s15 = sshll.u32 %s0, 4
      %s16 = int_to_ptr.hbm [resolvable:$true] %s15
      %s17 = sshll.u32 [#allocation2], 4
      %s18 = int_to_ptr.vmem [resolvable:$true] %s17
      %23 = dma.hbm_to_vmem [thread:$0]  %s16, 512, %s18, [#allocation3], 128, 128, 8
    $region5: #{tpu_custom_call.1} parent=1 // pred_fallthru
      _
    // Predicated region
    $region6: #{tpu_custom_call.1} parent=1 // pred_check
      _
    $region7: #{tpu_custom_call.1} parent=1 // pred_check_branch
      %25 = sbr.rel (0) target = $region9
    $region8: #{tpu_custom_call.1} parent=1 // pred_region
      %27 = vsyncadd [#allocation6], 0
      %s28 = sshll.u32 %s1, 4
      %s29 = int_to_ptr.hbm [resolvable:$true] %s28
      %s30 = sshll.u32 [#allocation5], 4
      %s31 = int_to_ptr.vmem [resolvable:$true] %s30
      %36 = dma.hbm_to_vmem [thread:$0]  %s29, 2048, %s31, [#allocation6], 64, 64, 4
    $region9: #{tpu_custom_call.1} parent=1 // pred_fallthru
      _
    // Predicated region
    $region10: #{tpu_custom_call.1} parent=1 // pred_check
      _
    $region11: #{tpu_custom_call.1} parent=1 // pred_check_branch
      %38 = sbr.rel (0) target = $region13
    $region12: #{tpu_custom_call.1} parent=1 // pred_region
      _
    $region13: #{tpu_custom_call.1} parent=1 // pred_fallthru
      _
    // Predicated region
    $region14: #{tpu_custom_call.1} parent=1 // pred_check
      _
    $region15: #{tpu_custom_call.1} parent=1 // pred_check_branch
      %40 = sbr.rel (0) target = $region17
    $region16: #{tpu_custom_call.1} parent=1 // pred_region
      %42 = dma.done [#allocation3], 512
    $region17: #{tpu_custom_call.1} parent=1 // pred_fallthru
      _
    // Predicated region
    $region18: #{tpu_custom_call.1} parent=1 // pred_check
      _
    $region19: #{tpu_custom_call.1} parent=1 // pred_check_branch
      %44 = sbr.rel (0) target = $region21
    $region20: #{tpu_custom_call.1} parent=1 // pred_region
      %46 = dma.done [#allocation6], 2048
    $region21: #{tpu_custom_call.1} parent=1 // pred_fallthru
      _
    %v47 = vld [vmem:[#allocation2] sm:$0xff]
    %v48 = vld [vmem:[#allocation2 + $0x8] sm:$0xff]
    %v49 = vld [vmem:[#allocation2 + $0x10] sm:$0xff]
    %v50 = vld [vmem:[#allocation2 + $0x18] sm:$0xff]
    %v51 = vld [vmem:[#allocation5] sm:$0xf]
    %v52 = vld [vmem:[#allocation5 + $0x4] sm:$0xf]
    %v53 = vld [vmem:[#allocation5 + $0x8] sm:$0xf]
    %v54 = vld [vmem:[#allocation5 + $0xc] sm:$0xf]
    %v55 = vld [vmem:[#allocation5 + $0x10] sm:$0xf]
    %v56 = vld [vmem:[#allocation5 + $0x14] sm:$0xf]
    %v57 = vld [vmem:[#allocation5 + $0x18] sm:$0xf]
    %v58 = vld [vmem:[#allocation5 + $0x1c] sm:$0xf]
    %v59 = vld [vmem:[#allocation5 + $0x20] sm:$0xf]
    %v60 = vld [vmem:[#allocation5 + $0x24] sm:$0xf]
    %v61 = vld [vmem:[#allocation5 + $0x28] sm:$0xf]
    %v62 = vld [vmem:[#allocation5 + $0x2c] sm:$0xf]
    %v63 = vld [vmem:[#allocation5 + $0x30] sm:$0xf]
    %v64 = vld [vmem:[#allocation5 + $0x34] sm:$0xf]
    %v65 = vld [vmem:[#allocation5 + $0x38] sm:$0xf]
    %v66 = vld [vmem:[#allocation5 + $0x3c] sm:$0xf]
    %v67 = vld [vmem:[#allocation5 + $0x40] sm:$0xf]
    %v68 = vld [vmem:[#allocation5 + $0x44] sm:$0xf]
    %v69 = vld [vmem:[#allocation5 + $0x48] sm:$0xf]
    %v70 = vld [vmem:[#allocation5 + $0x4c] sm:$0xf]
    %v71 = vld [vmem:[#allocation5 + $0x50] sm:$0xf]
    %v72 = vld [vmem:[#allocation5 + $0x54] sm:$0xf]
    %v73 = vld [vmem:[#allocation5 + $0x58] sm:$0xf]
    %v74 = vld [vmem:[#allocation5 + $0x5c] sm:$0xf]
    %v75 = vld [vmem:[#allocation5 + $0x60] sm:$0xf]
    %v76 = vld [vmem:[#allocation5 + $0x64] sm:$0xf]
    %v77 = vld [vmem:[#allocation5 + $0x68] sm:$0xf]
    %v78 = vld [vmem:[#allocation5 + $0x6c] sm:$0xf]
    %v79 = vld [vmem:[#allocation5 + $0x70] sm:$0xf]
    %v80 = vld [vmem:[#allocation5 + $0x74] sm:$0xf]
    %v81 = vld [vmem:[#allocation5 + $0x78] sm:$0xf]
    %v82 = vld [vmem:[#allocation5 + $0x7c] sm:$0xf]
    %v83 = vld [vmem:[%s2] sm:$0x1]
    %v85 = vperm.slane %v83, 0
    %v91 = vunpack.c.l.b16 %v47
    %v92 = vunpack.c.h.b16 %v47
    %v93 = vunpack.c.l.b16 %v48
    %v94 = vunpack.c.h.b16 %v48
    %v95 = vunpack.c.l.b16 %v49
    %v96 = vunpack.c.h.b16 %v49
    %v97 = vunpack.c.l.b16 %v50
    %v98 = vunpack.c.h.b16 %v50
    %v99 = vpack.c.b16 %v93, %v91
    %v100 = vpack.c.b16 %v94, %v92
    %v101 = vpack.c.b16 %v97, %v95
    %v102 = vpack.c.b16 %v98, %v96
    %v139 = vunpack.c.l.b16 %v51
    %v140 = vunpack.c.l.b16 %v52
    %v141 = vunpack.c.l.b16 %v53
    %v142 = vunpack.c.l.b16 %v54
    %v143 = vunpack.c.l.b16 %v55
    %v144 = vunpack.c.l.b16 %v56
    %v145 = vunpack.c.l.b16 %v57
    %v146 = vunpack.c.l.b16 %v58
    %v147 = vunpack.c.l.b16 %v59
    %v148 = vunpack.c.l.b16 %v60
    %v149 = vunpack.c.l.b16 %v61
    %v150 = vunpack.c.l.b16 %v62
    %v151 = vunpack.c.l.b16 %v63
    %v152 = vunpack.c.l.b16 %v64
    %v153 = vunpack.c.l.b16 %v65
    %v154 = vunpack.c.l.b16 %v66
    %v155 = vunpack.c.l.b16 %v67
    %v156 = vunpack.c.l.b16 %v68
    %v157 = vunpack.c.l.b16 %v69
    %v158 = vunpack.c.l.b16 %v70
    %v159 = vunpack.c.l.b16 %v71
    %v160 = vunpack.c.l.b16 %v72
    %v161 = vunpack.c.l.b16 %v73
    %v162 = vunpack.c.l.b16 %v74
    %v163 = vunpack.c.l.b16 %v75
    %v164 = vunpack.c.l.b16 %v76
    %v165 = vunpack.c.l.b16 %v77
    %v166 = vunpack.c.l.b16 %v78
    %v167 = vunpack.c.l.b16 %v79
    %v168 = vunpack.c.l.b16 %v80
    %v169 = vunpack.c.l.b16 %v81
    %v170 = vunpack.c.l.b16 %v82
    %v171 = vpack.c.b16 %v140, %v139
    %v172 = vpack.c.b16 %v142, %v141
    %v173 = vpack.c.b16 %v144, %v143
    %v174 = vpack.c.b16 %v146, %v145
    %v175 = vpack.c.b16 %v148, %v147
    %v176 = vpack.c.b16 %v150, %v149
    %v177 = vpack.c.b16 %v152, %v151
    %v178 = vpack.c.b16 %v154, %v153
    %v179 = vpack.c.b16 %v156, %v155
    %v180 = vpack.c.b16 %v158, %v157
    %v181 = vpack.c.b16 %v160, %v159
    %v182 = vpack.c.b16 %v162, %v161
    %v183 = vpack.c.b16 %v164, %v163
    %v184 = vpack.c.b16 %v166, %v165
    %v185 = vpack.c.b16 %v168, %v167
    %v186 = vpack.c.b16 %v170, %v169
    %203 = vmatpush.bf16.msra.mxu0 %v178
    %204 = vmatpush.bf16.msra.mxu0 %v177
    %205 = vmatpush.bf16.msra.mxu0 %v176
    %206 = vmatpush.bf16.msra.mxu0 %v175
    %207 = vmatpush.bf16.msra.mxu0 %v174
    %208 = vmatpush.bf16.msra.mxu0 %v173
    %209 = vmatpush.bf16.msra.mxu0 %v172
    %210 = vmatpush.bf16.msra.mxu0 %v171
    %211 = vmatmul.bf16.gmra.mxu0 %v99
    %v212 = vpop.f32.mrf.mxu0
    %v213 = vadd.f32 %v85, %v212
    %v214 = vpop.f32.mrf.mxu0
    %v215 = vadd.f32 %v85, %v214
    %216 = vmatmul.bf16.gmra.mxu0 %v101
    %v217 = vpop.f32.mrf.mxu0
    %v218 = vadd.f32 %v85, %v217
    %v219 = vpop.f32.mrf.mxu0
    %v220 = vadd.f32 %v85, %v219
    %221 = vdwg.mxu0
    %222 = vmatpush.bf16.msra.mxu0 %v186
    %223 = vmatpush.bf16.msra.mxu0 %v185
    %224 = vmatpush.bf16.msra.mxu0 %v184
    %225 = vmatpush.bf16.msra.mxu0 %v183
    %226 = vmatpush.bf16.msra.mxu0 %v182
    %227 = vmatpush.bf16.msra.mxu0 %v181
    %228 = vmatpush.bf16.msra.mxu0 %v180
    %229 = vmatpush.bf16.msra.mxu0 %v179
    %230 = vmatmul.bf16.gmra.mxu0 %v100
    %v231 = vpop.f32.mrf.mxu0
    %v232 = vadd.f32 %v213, %v231
    %v233 = vpop.f32.mrf.mxu0
    %v234 = vadd.f32 %v215, %v233
    %235 = vmatmul.bf16.gmra.mxu0 %v102
    %v236 = vpop.f32.mrf.mxu0
    %v237 = vadd.f32 %v218, %v236
    %v238 = vpop.f32.mrf.mxu0
    %v239 = vadd.f32 %v220, %v238
    %240 = vdwg.mxu0
    %241 = vst [vmem:[#allocation7] sm:$0xff] %v232
    %242 = vst [vmem:[#allocation7 + $0x8] sm:$0xff] %v234
    %243 = vst [vmem:[#allocation7 + $0x10] sm:$0xff] %v237
    %244 = vst [vmem:[#allocation7 + $0x18] sm:$0xff] %v239
    // Predicated region
    $region22: #{tpu_custom_call.1} parent=1 // pred_check
      _
    $region23: #{tpu_custom_call.1} parent=1 // pred_check_branch
      %246 = sbr.rel (0) target = $region25
    $region24: #{tpu_custom_call.1} parent=1 // pred_region
      %248 = vsyncadd [#allocation4], 0
      %s249 = sshll.u32 [#allocation7], 4
      %s250 = int_to_ptr.vmem [resolvable:$true] %s249
      %s251 = sshll.u32 %s3, 4
      %s252 = int_to_ptr.hbm [resolvable:$true] %s251
      %257 = dma.vmem_to_hbm [thread:$0]  %s250, 512, %s252, [#allocation4], 128, 128, 8
    $region25: #{tpu_custom_call.1} parent=1 // pred_fallthru
      _
    // Predicated region
    $region26: #{tpu_custom_call.1} parent=1 // pred_check
      _
    $region27: #{tpu_custom_call.1} parent=1 // pred_check_branch
      %259 = sbr.rel (0) target = $region29
    $region28: #{tpu_custom_call.1} parent=1 // pred_region
      %261 = dma.done [#allocation4], 512
    $region29: #{tpu_custom_call.1} parent=1 // pred_fallthru
      _
    %262 = vsyncpa [#allocation3], 1
    %263 = vsyncpa [#allocation6], 1
    %264 = vsyncpa [#allocation4], 1

</llo_original>
